<compile_context>
chip_gen: v5e
topology: v5e:2x2
jax: 0.10.0
libtpu: 0.0.40
codegen_flags: <defaults>
</compile_context>

<pallas_src>
import functools

import jax
import jax.numpy as jnp
from jax.experimental import pallas as pl
from jax.experimental.pallas import tpu as pltpu

IN_FEATURES = 8 * 8     # 64
HIDDEN = 16
OUT_FEATURES = 2
HIDDEN_PAD = 128        # pad fc1 output to a full lane width (MXU N dim)
OUT_PAD = 128           # pad fc2 output -> lane-dense, unmasked stores


def _mlp_kernel(x_ref, w1_ref, b1_ref, w2_ref, b2_ref, o_ref):
    # x tile: (TM, 64) bf16.  Weights/biases are the same VMEM-resident block
    # for every grid step.  Fused: relu(x @ W1 + b1) @ W2 + b2, f32 accumulate.
    x = x_ref[...]
    h = jnp.dot(x, w1_ref[...], preferred_element_type=jnp.float32)    # (TM, 128) f32
    h = jnp.maximum(h + b1_ref[...], 0.0)                              # bias + ReLU
    o = jnp.dot(h.astype(jnp.bfloat16), w2_ref[...],
                preferred_element_type=jnp.float32)                    # (TM, 128) f32
    o_ref[...] = (o + b2_ref[...]).astype(o_ref.dtype)


def _round_up(n, m):
    return ((n + m - 1) // m) * m


@functools.partial(jax.jit, static_argnames=("tm",))
def simple_nn_forward(x, w1, b1, w2, b2, *, tm=256):
    """x: anything flattening to (B, 64); w1: (64,16); b1: (16,); w2: (16,2); b2: (2,).

    Returns (B, 2) float32, matching torch fc2(relu(fc1(x.view(-1, 64)))).
    NOTE: for repeated tiny calls, batch at the call site — per-call launch
    overhead dominates until B is in the hundreds.
    """
    x2d = x.reshape(-1, IN_FEATURES).astype(jnp.float32)    # == torch .view(-1, 64)
    B = x2d.shape[0]

    # Batch tile: as large as the (sublane-padded) batch allows, capped at `tm`
    # (256 fills the v6e/v7x 256-wide MXU M dim; VMEM is never the constraint).
    b8 = _round_up(B, 8)
    TM = tm if b8 >= tm else b8
    B_pad = _round_up(b8, TM)

    # Activations stream as bf16 (half the HBM->VMEM bytes); accumulate in f32.
    x_p = jnp.zeros((B_pad, IN_FEATURES), jnp.bfloat16).at[:B].set(
        x2d.astype(jnp.bfloat16))

    # Zero-pad weights/biases so both matmuls run at full MXU lane width and
    # the output slab is lane-dense.  Extra hidden cols: W1 cols are zero and
    # b1 entries are zero -> ReLU(0) = 0 -> multiplied by zero W2 rows. Exact.
    w1_p = jnp.zeros((IN_FEATURES, HIDDEN_PAD), jnp.bfloat16).at[:, :HIDDEN].set(
        w1.astype(jnp.bfloat16))
    b1_p = jnp.zeros((1, HIDDEN_PAD), jnp.float32).at[:, :HIDDEN].set(
        b1.reshape(1, -1).astype(jnp.float32))
    w2_p = jnp.zeros((HIDDEN_PAD, OUT_PAD), jnp.bfloat16).at[:HIDDEN, :OUT_FEATURES].set(
        w2.astype(jnp.bfloat16))
    b2_p = jnp.zeros((1, OUT_PAD), jnp.float32).at[:, :OUT_FEATURES].set(
        b2.reshape(1, -1).astype(jnp.float32))

    vmem = pltpu.MemorySpace.VMEM
    grid = (B_pad // TM,)

    flops = 2 * B_pad * (IN_FEATURES * HIDDEN_PAD + HIDDEN_PAD * OUT_PAD)
    bytes_accessed = (x_p.size * 2 + B_pad * OUT_PAD * 4
                      + w1_p.size * 2 + w2_p.size * 2
                      + b1_p.size * 4 + b2_p.size * 4)

    out_padded = pl.pallas_call(
        _mlp_kernel,
        out_shape=jax.ShapeDtypeStruct((B_pad, OUT_PAD), jnp.float32),
        grid=grid,
        in_specs=[
            # Activations stream over the batch grid axis (double-buffered).
            pl.BlockSpec((TM, IN_FEATURES), lambda i: (i, 0), memory_space=vmem),
            # Weights/biases: same block every step -> resident in VMEM.
            pl.BlockSpec((IN_FEATURES, HIDDEN_PAD), lambda i: (0, 0), memory_space=vmem),
            pl.BlockSpec((1, HIDDEN_PAD), lambda i: (0, 0), memory_space=vmem),
            pl.BlockSpec((HIDDEN_PAD, OUT_PAD), lambda i: (0, 0), memory_space=vmem),
            pl.BlockSpec((1, OUT_PAD), lambda i: (0, 0), memory_space=vmem),
        ],
        out_specs=pl.BlockSpec((TM, OUT_PAD), lambda i: (i, 0), memory_space=vmem),
        compiler_params=pltpu.CompilerParams(
            dimension_semantics=("parallel",)),   # batch axis across v7x's 2 TCs
        cost_estimate=pl.CostEstimate(
            flops=flops, transcendentals=0, bytes_accessed=bytes_accessed),
    )(x_p, w1_p, b1_p, w2_p, b2_p)

    # Strip batch padding and the lane padding on the logits.
    return out_padded[:B, :OUT_FEATURES]


def init_params(key):
    """Deterministic init mimicking nn.Linear (uniform +/- 1/sqrt(fan_in)).
    Weights stored as (in_features, out_features) = torch weight transposed."""
    k1, k2, k3, k4 = jax.random.split(key, 4)
    lim1 = 1.0 / jnp.sqrt(64.0)
    lim2 = 1.0 / jnp.sqrt(16.0)
    w1 = jax.random.uniform(k1, (IN_FEATURES, HIDDEN), jnp.float32, -lim1, lim1)
    b1 = jax.random.uniform(k2, (HIDDEN,), jnp.float32, -lim1, lim1)
    w2 = jax.random.uniform(k3, (HIDDEN, OUT_FEATURES), jnp.float32, -lim2, lim2)
    b2 = jax.random.uniform(k4, (OUT_FEATURES,), jnp.float32, -lim2, lim2)
    return w1, b1, w2, b2


if __name__ == "__main__":
    key = jax.random.PRNGKey(0)
    k_params, k_x = jax.random.split(key)
    w1, b1, w2, b2 = init_params(k_params)

    # Batch of 2 "images" of shape 8x8 (what the 8*8 flatten implies).
    x = jax.random.normal(k_x, (2, 8, 8), dtype=jnp.float32)

    out = simple_nn_forward(x, w1, b1, w2, b2)
    out = jax.block_until_ready(out)

    # Reference in plain JAX (f32); kernel streams bf16 activations/weights
    # with f32 accumulation, so compare at bf16-appropriate tolerance.
    ref = jnp.maximum(x.reshape(-1, 64) @ w1 + b1, 0.0) @ w2 + b2
    assert out.shape == (2, OUT_FEATURES)
    assert jnp.allclose(out, ref, atol=5e-2, rtol=5e-2)

    print("KERNEL_OK")
</pallas_src>

<mosaic_0001>
module attributes {stable_mosaic.version = 11 : i64} {
  func.func @_mlp_kernel(%arg0: i32, %arg1: memref<8x64xbf16, #tpu.memory_space<vmem>>, %arg2: memref<64x128xbf16, #tpu.memory_space<vmem>>, %arg3: memref<1x128xf32, #tpu.memory_space<vmem>>, %arg4: memref<128x128xbf16, #tpu.memory_space<vmem>>, %arg5: memref<1x128xf32, #tpu.memory_space<vmem>>, %arg6: memref<8x128xf32, #tpu.memory_space<vmem>>) attributes {dimension_semantics = [#tpu.dimension_semantics<parallel>], iteration_bounds = array<i64: 1>, scalar_prefetch = 0 : i64, scratch_operands = 0 : i64, tpu.core_type = #tpu.core_type<tc>, window_params = [{transform_indices = @transform_0, window_bounds = array<i64: 8, 64>}, {pipeline_mode = #tpu.pipeline_mode<synchronous>, transform_indices = @transform_1, window_bounds = array<i64: 64, 128>}, {pipeline_mode = #tpu.pipeline_mode<synchronous>, transform_indices = @transform_2, window_bounds = array<i64: 1, 128>}, {pipeline_mode = #tpu.pipeline_mode<synchronous>, transform_indices = @transform_3, window_bounds = array<i64: 128, 128>}, {pipeline_mode = #tpu.pipeline_mode<synchronous>, transform_indices = @transform_4, window_bounds = array<i64: 1, 128>}, {transform_indices = @transform_5, window_bounds = array<i64: 8, 128>}]} {
    %c0 = arith.constant 0 : index
    %c0_0 = arith.constant 0 : index
    %0 = vector.load %arg1[%c0, %c0_0] : memref<8x64xbf16, #tpu.memory_space<vmem>>, vector<8x64xbf16>
    %c0_1 = arith.constant 0 : index
    %c0_2 = arith.constant 0 : index
    %1 = vector.load %arg2[%c0_1, %c0_2] : memref<64x128xbf16, #tpu.memory_space<vmem>>, vector<64x128xbf16>
    %cst = arith.constant dense<0.000000e+00> : vector<8x128xf32>
    %2 = tpu.matmul %0, %1, %cst {dimension_numbers = #tpu.dot_dimension_numbers<[1], [0], [0], [1], [0, 0, 1, 1], [], []>} : vector<8x64xbf16>, vector<64x128xbf16>, vector<8x128xf32> -> vector<8x128xf32>
    %c0_3 = arith.constant 0 : index
    %c0_4 = arith.constant 0 : index
    %3 = vector.load %arg3[%c0_3, %c0_4] : memref<1x128xf32, #tpu.memory_space<vmem>>, vector<1x128xf32>
    %4 = vector.broadcast %3 : vector<1x128xf32> to vector<8x128xf32>
    %5 = arith.addf %2, %4 : vector<8x128xf32>
    %cst_5 = arith.constant 0.000000e+00 : f32
    %6 = vector.broadcast %cst_5 : f32 to vector<8x128xf32>
    %7 = arith.maximumf %5, %6 : vector<8x128xf32>
    %8 = arith.truncf %7 : vector<8x128xf32> to vector<8x128xbf16>
    %c0_6 = arith.constant 0 : index
    %c0_7 = arith.constant 0 : index
    %9 = vector.load %arg4[%c0_6, %c0_7] : memref<128x128xbf16, #tpu.memory_space<vmem>>, vector<128x128xbf16>
    %cst_8 = arith.constant dense<0.000000e+00> : vector<8x128xf32>
    %10 = tpu.matmul %8, %9, %cst_8 {dimension_numbers = #tpu.dot_dimension_numbers<[1], [0], [0], [1], [0, 0, 1, 1], [], []>} : vector<8x128xbf16>, vector<128x128xbf16>, vector<8x128xf32> -> vector<8x128xf32>
    %c0_9 = arith.constant 0 : index
    %c0_10 = arith.constant 0 : index
    %11 = vector.load %arg5[%c0_9, %c0_10] : memref<1x128xf32, #tpu.memory_space<vmem>>, vector<1x128xf32>
    %12 = vector.broadcast %11 : vector<1x128xf32> to vector<8x128xf32>
    %13 = arith.addf %10, %12 : vector<8x128xf32>
    %c0_11 = arith.constant 0 : index
    %c0_12 = arith.constant 0 : index
    %14 = vector.load %arg6[%c0_11, %c0_12] : memref<8x128xf32, #tpu.memory_space<vmem>>, vector<8x128xf32>
    tpu.vector_store %arg6[%c0_11, %c0_12], %13 {strides = array<i32>} : memref<8x128xf32, #tpu.memory_space<vmem>>, vector<8x128xf32>,
    return
  }
  func.func @transform_0(%arg0: i32) -> (i32, i32) {
    %c0_i32 = arith.constant 0 : i32
    %c0_i32_0 = arith.constant 0 : i32
    return %arg0, %c0_i32 : i32, i32
  }
  func.func @transform_1(%arg0: i32) -> (i32, i32) {
    %c0_i32 = arith.constant 0 : i32
    %c0_i32_0 = arith.constant 0 : i32
    %c0_i32_1 = arith.constant 0 : i32
    return %c0_i32, %c0_i32_0 : i32, i32
  }
  func.func @transform_2(%arg0: i32) -> (i32, i32) {
    %c0_i32 = arith.constant 0 : i32
    %c0_i32_0 = arith.constant 0 : i32
    %c0_i32_1 = arith.constant 0 : i32
    return %c0_i32, %c0_i32_0 : i32, i32
  }
  func.func @transform_3(%arg0: i32) -> (i32, i32) {
    %c0_i32 = arith.constant 0 : i32
    %c0_i32_0 = arith.constant 0 : i32
    %c0_i32_1 = arith.constant 0 : i32
    return %c0_i32, %c0_i32_0 : i32, i32
  }
  func.func @transform_4(%arg0: i32) -> (i32, i32) {
    %c0_i32 = arith.constant 0 : i32
    %c0_i32_0 = arith.constant 0 : i32
    %c0_i32_1 = arith.constant 0 : i32
    return %c0_i32, %c0_i32_0 : i32, i32
  }
  func.func @transform_5(%arg0: i32) -> (i32, i32) {
    %c0_i32 = arith.constant 0 : i32
    %c0_i32_0 = arith.constant 0 : i32
    return %arg0, %c0_i32 : i32, i32
  }
}

</mosaic_0001>

<llo_original>
// kernel: simple_nn_forward.1
$region0: #{simple_nn_forward.1}
  #allocation0 [shape = 'u32[]', space=smem, size = 0x4, offset = 0x4, fixed_abs, tag = 'smem constant byte address 0x4 - core index']
  #allocation1 [shape = 'u32[72,128]{1,0:T(1,128)}', space=vmem, size = 0x9000, scoped, tag = 'internal scratch']
  %s0 = inlined_call_operand.vmem [shape: bf16[8,64], index: 0, kind: input, shape index: {}]
  %s1 = inlined_call_operand.vmem [shape: bf16[64,128], index: 1, kind: input, shape index: {}]
  %s2 = inlined_call_operand.vmem [shape: f32[1,128], index: 2, kind: input, shape index: {}]
  %s3 = inlined_call_operand.vmem [shape: bf16[128,128], index: 3, kind: input, shape index: {}]
  %s4 = inlined_call_operand.vmem [shape: f32[1,128], index: 4, kind: input, shape index: {}]
  %s5 = inlined_call_operand.vmem [shape: f32[8,128], index: 5, kind: output, shape index: {}]
  %s6 = sld [smem:[#allocation0]]
  $region30: #{simple_nn_forward.1} parent=0
    _
  %s8 = ssub.s32 1, %s6
  %s9 = scalar_select 0, %s8, %s6
  // Predicated region
  $region2: #{simple_nn_forward.1} parent=0 // pred_check
    _
  $region3: #{simple_nn_forward.1} parent=0 // pred_check_branch
    %11 = sbr.rel (0) target = $region5
  $region4: #{simple_nn_forward.1} parent=0 // pred_region
    _
  $region5: #{simple_nn_forward.1} parent=0 // pred_fallthru
    _
  // Predicated region
  $region6: #{simple_nn_forward.1} parent=0 // pred_check
    _
  $region7: #{simple_nn_forward.1} parent=0 // pred_check_branch
    %13 = sbr.rel (0) target = $region9
  $region8: #{simple_nn_forward.1} parent=0 // pred_region
    _
  $region9: #{simple_nn_forward.1} parent=0 // pred_fallthru
    _
  // Predicated region
  $region10: #{simple_nn_forward.1} parent=0 // pred_check
    _
  $region11: #{simple_nn_forward.1} parent=0 // pred_check_branch
    %15 = sbr.rel (0) target = $region13
  $region12: #{simple_nn_forward.1} parent=0 // pred_region
    _
  $region13: #{simple_nn_forward.1} parent=0 // pred_fallthru
    _
  // Predicated region
  $region14: #{simple_nn_forward.1} parent=0 // pred_check
    _
  $region15: #{simple_nn_forward.1} parent=0 // pred_check_branch
    %17 = sbr.rel (0) target = $region17
  $region16: #{simple_nn_forward.1} parent=0 // pred_region
    _
  $region17: #{simple_nn_forward.1} parent=0 // pred_fallthru
    _
  // Predicated region
  $region18: #{simple_nn_forward.1} parent=0 // pred_check
    _
  $region19: #{simple_nn_forward.1} parent=0 // pred_check_branch
    %19 = sbr.rel (0) target = $region21
  $region20: #{simple_nn_forward.1} parent=0 // pred_region
    _
  $region21: #{simple_nn_forward.1} parent=0 // pred_fallthru
    _
  %v21 = vld [vmem:[%s0] sm:$0xf]
  %v22 = vld [vmem:[%s1] sm:$0xf]
  %v23 = vld [vmem:[%s1 + $0x4] sm:$0xf]
  %v24 = vld [vmem:[%s1 + $0x8] sm:$0xf]
  %v25 = vld [vmem:[%s1 + $0xc] sm:$0xf]
  %v26 = vld [vmem:[%s1 + $0x10] sm:$0xf]
  %v27 = vld [vmem:[%s1 + $0x14] sm:$0xf]
  %v28 = vld [vmem:[%s1 + $0x18] sm:$0xf]
  %v29 = vld [vmem:[%s1 + $0x1c] sm:$0xf]
  %v30 = vld [vmem:[%s2] sm:$0x1]
  %v32 = vperm.slane %v30, 0
  %v42 = vunpack.c.l.b16 %v22
  %v43 = vunpack.c.l.b16 %v23
  %v44 = vunpack.c.l.b16 %v24
  %v45 = vunpack.c.l.b16 %v25
  %v46 = vunpack.c.l.b16 %v26
  %v47 = vunpack.c.l.b16 %v27
  %v48 = vunpack.c.l.b16 %v28
  %v49 = vunpack.c.l.b16 %v29
  %v50 = vpack.c.b16 %v43, %v42
  %v51 = vpack.c.b16 %v45, %v44
  %v52 = vpack.c.b16 %v47, %v46
  %v53 = vpack.c.b16 %v49, %v48
  %vm58 = vcmask 523264
  %v60 = vsel %vm58, %v21, 0
  %62 = vmatpush.bf16.msra.mxu0 0
  %63 = vmatpush.bf16.msra.mxu0 0
  %64 = vmatpush.bf16.msra.mxu0 0
  %65 = vmatpush.bf16.msra.mxu0 0
  %66 = vmatpush.bf16.msra.mxu0 %v53
  %67 = vmatpush.bf16.msra.mxu0 %v52
  %68 = vmatpush.bf16.msra.mxu0 %v51
  %69 = vmatpush.bf16.msra.mxu0 %v50
  %70 = vmatmul.bf16.gmra.mxu0 %v60
  %v71 = vpop.f32.mrf.mxu0
  %v72 = vadd.f32 %v32, %v71
  %v73 = vpop.f32.mrf.mxu0
  %74 = vdwg.mxu0
  %v75 = vmax.f32 %v72, 0.0
  %v76 = vpack.c.bf16 %v75, %v75
  %v77 = vld [vmem:[%s3] sm:$0xf]
  %v78 = vld [vmem:[%s3 + $0x4] sm:$0xf]
  %v79 = vld [vmem:[%s3 + $0x8] sm:$0xf]
  %v80 = vld [vmem:[%s3 + $0xc] sm:$0xf]
  %v81 = vld [vmem:[%s3 + $0x10] sm:$0xf]
  %v82 = vld [vmem:[%s3 + $0x14] sm:$0xf]
  %v83 = vld [vmem:[%s3 + $0x18] sm:$0xf]
  %v84 = vld [vmem:[%s3 + $0x1c] sm:$0xf]
  %v85 = vld [vmem:[%s3 + $0x20] sm:$0xf]
  %v86 = vld [vmem:[%s3 + $0x24] sm:$0xf]
  %v87 = vld [vmem:[%s3 + $0x28] sm:$0xf]
  %v88 = vld [vmem:[%s3 + $0x2c] sm:$0xf]
  %v89 = vld [vmem:[%s3 + $0x30] sm:$0xf]
  %v90 = vld [vmem:[%s3 + $0x34] sm:$0xf]
  %v91 = vld [vmem:[%s3 + $0x38] sm:$0xf]
  %v92 = vld [vmem:[%s3 + $0x3c] sm:$0xf]
  %v93 = vld [vmem:[%s4] sm:$0x1]
  %v95 = vperm.slane %v93, 0
  %v113 = vunpack.c.l.b16 %v77
  %v114 = vunpack.c.l.b16 %v78
  %v115 = vunpack.c.l.b16 %v79
  %v116 = vunpack.c.l.b16 %v80
  %v117 = vunpack.c.l.b16 %v81
  %v118 = vunpack.c.l.b16 %v82
  %v119 = vunpack.c.l.b16 %v83
  %v120 = vunpack.c.l.b16 %v84
  %v121 = vunpack.c.l.b16 %v85
  %v122 = vunpack.c.l.b16 %v86
  %v123 = vunpack.c.l.b16 %v87
  %v124 = vunpack.c.l.b16 %v88
  %v125 = vunpack.c.l.b16 %v89
  %v126 = vunpack.c.l.b16 %v90
  %v127 = vunpack.c.l.b16 %v91
  %v128 = vunpack.c.l.b16 %v92
  %v129 = vpack.c.b16 %v114, %v113
  %v130 = vpack.c.b16 %v116, %v115
  %v131 = vpack.c.b16 %v118, %v117
  %v132 = vpack.c.b16 %v120, %v119
  %v133 = vpack.c.b16 %v122, %v121
  %v134 = vpack.c.b16 %v124, %v123
  %v135 = vpack.c.b16 %v126, %v125
  %v136 = vpack.c.b16 %v128, %v127
  %145 = vmatpush.bf16.msra.mxu0 %v136
  %146 = vmatpush.bf16.msra.mxu0 %v135
  %147 = vmatpush.bf16.msra.mxu0 %v134
  %148 = vmatpush.bf16.msra.mxu0 %v133
  %149 = vmatpush.bf16.msra.mxu0 %v132
  %150 = vmatpush.bf16.msra.mxu0 %v131
  %151 = vmatpush.bf16.msra.mxu0 %v130
  %152 = vmatpush.bf16.msra.mxu0 %v129
  %153 = vmatmul.bf16.gmra.mxu0 %v76
  %v154 = vpop.f32.mrf.mxu0
  %v155 = vadd.f32 %v95, %v154
  %v156 = vpop.f32.mrf.mxu0
  %157 = vdwg.mxu0
  %158 = vst [vmem:[%s5] sm:$0xff] %v155
  // Predicated region
  $region22: #{simple_nn_forward.1} parent=0 // pred_check
    _
  $region23: #{simple_nn_forward.1} parent=0 // pred_check_branch
    %160 = sbr.rel (0) target = $region25
  $region24: #{simple_nn_forward.1} parent=0 // pred_region
    _
  $region25: #{simple_nn_forward.1} parent=0 // pred_fallthru
    _
  // Predicated region
  $region26: #{simple_nn_forward.1} parent=0 // pred_check
    _
  $region27: #{simple_nn_forward.1} parent=0 // pred_check_branch
    %162 = sbr.rel (0) target = $region29
  $region28: #{simple_nn_forward.1} parent=0 // pred_region
    _
  $region29: #{simple_nn_forward.1} parent=0 // pred_fallthru
    _

</llo_original>
